<compile_context>
chip_gen: v7x
topology: tpu7x:2x2x1
jax: 0.10.0
libtpu: 0.0.40
codegen_flags: <defaults>
</compile_context>

<pallas_src>
import functools
import math

import jax
import jax.numpy as jnp
from jax.experimental import pallas as pl
from jax.experimental.pallas import tpu as pltpu

TILE = 128           # destination/source row tile (sublane aligned, keeps matmuls lane-dense)
NEG_INF = -1e30


def _compiler_params(dim_sem):
    return pltpu.CompilerParams(
        dimension_semantics=dim_sem,
        # explicit budget, sized to fit v7x's 64 MiB VMEM with headroom (tiles here are tiny)
        vmem_limit_bytes=48 * 1024 * 1024,
    )


# ----------------------------------------------------------------------------
# Kernel 1: per-metapath projection (values + folded attention-score columns)
# ----------------------------------------------------------------------------
def _proj_kernel(h_ref, waug_ref, wh_ref, sc_ref, *, d_model):
    # h_ref: (TILE, Fin) bf16, waug_ref: (Fin, D + 2H) bf16
    proj = jnp.dot(h_ref[...], waug_ref[...], preferred_element_type=jnp.float32)
    wh_ref[...] = proj[:, :d_model].astype(wh_ref.dtype)    # (TILE, D)  projected features
    sc_ref[...] = proj[:, d_model:]                         # (TILE, 2H) [el | er] scores (f32)


# ----------------------------------------------------------------------------
# Kernel 2: per-metapath GAT attention + aggregation + partial semantic sums
# ----------------------------------------------------------------------------
def _gat_kernel(adj_ref, wh_ref, scT_ref, scd_ref, sw1_ref, sb1_ref,
                z_ref, tsum_ref, *, num_heads, out_feats):
    # adj_ref : (TILE, N)   int8  rows = destination nodes of this tile
    # wh_ref  : (N, D)      bf16  projected features of ALL source nodes (path p, revisited)
    # scT_ref : (2H, N)     f32   [el ; er] scores, lane-major over source nodes (revisited)
    # scd_ref : (TILE, 2H)  f32   scores of this destination tile (for er)
    # z_ref   : (TILE, D)   bf16  per-path GAT embedding
    # tsum_ref: (1, SH)     f32   accumulator of sum_n tanh(z @ sw1 + sb1) across dst tiles
    mask = adj_ref[...].astype(jnp.float32) > 0.0            # bool edge mask (int8 storage)
    wh = wh_ref[...]
    sc_dst = scd_ref[...]

    heads = []
    for hh in range(num_heads):
        el_row = scT_ref[hh:hh + 1, :]                                   # (1, N)    src score
        er_col = sc_dst[:, num_heads + hh:num_heads + hh + 1]            # (TILE, 1) dst score
        e = er_col + el_row                                              # (TILE, N)
        e = jnp.maximum(e, 0.2 * e)                                      # LeakyReLU(0.2)
        e = jnp.where(mask, e, NEG_INF)                                  # mask non-edges
        e = e - jnp.max(e, axis=1, keepdims=True)                        # safe row max
        a = jnp.exp(e)                                                   # masked -> underflow to 0
        # self-loops guarantee >= 1 real edge per row, so the denominator is >= 1
        # (no eps needed); approx reciprocal rides the EUP slot.
        alpha = a * pl.reciprocal(jnp.sum(a, axis=1, keepdims=True), approx=True)
        wh_h = wh[:, hh * out_feats:(hh + 1) * out_feats]                # lane-aligned slice
        agg = jnp.dot(alpha.astype(wh.dtype), wh_h,
                      preferred_element_type=jnp.float32)                # (TILE, Fout) on MXU
        heads.append(jnp.where(agg > 0, agg,
                               jnp.exp(jnp.minimum(agg, 0.0)) - 1.0))    # ELU (no inf branch)
    z = jnp.concatenate(heads, axis=1)                                   # (TILE, D) f32
    z_ref[...] = z.astype(z_ref.dtype)

    # Partial semantic-attention statistics (beta is finalized in the combine kernel).
    t = jnp.tanh(jnp.dot(z.astype(sw1_ref.dtype), sw1_ref[...],
                         preferred_element_type=jnp.float32) + sb1_ref[...])   # (TILE, SH)

    @pl.when(pl.program_id(1) == 0)
    def _():
        tsum_ref[...] = jnp.zeros_like(tsum_ref)

    tsum_ref[...] += jnp.sum(t, axis=0, keepdims=True)


# ----------------------------------------------------------------------------
# Kernel 3: semantic softmax + beta-weighted combine (+ fused final Linear)
# ----------------------------------------------------------------------------
def _combine_kernel(z_ref, tsum_ref, sw2t_ref, *rest, inv_n, apply_linear):
    if apply_linear:
        w_ref, b_ref, o_ref = rest
    else:
        (o_ref,) = rest

    # beta = softmax_p( mean_n( tanh(z_p @ sw1 + sb1) ) @ sw2 )
    logits = jnp.sum(tsum_ref[...] * sw2t_ref[...][None], axis=2) * inv_n        # (P, 1)
    logits = logits - jnp.max(logits, axis=0, keepdims=True)
    ex = jnp.exp(logits)
    beta = ex * pl.reciprocal(jnp.sum(ex, axis=0, keepdims=True), approx=False)  # (P, 1)

    num_paths = z_ref.shape[0]
    h_out = z_ref[0].astype(jnp.float32) * beta[0:1, 0:1]
    for p in range(1, num_paths):
        h_out = h_out + z_ref[p].astype(jnp.float32) * beta[p:p + 1, 0:1]        # (TILE, D)

    if apply_linear:
        out = jnp.dot(h_out.astype(w_ref.dtype), w_ref[...],
                      preferred_element_type=jnp.float32) + b_ref[...]
        o_ref[...] = out.astype(o_ref.dtype)
    else:
        o_ref[...] = h_out.astype(o_ref.dtype)


# ----------------------------------------------------------------------------
# Layer wrapper
# ----------------------------------------------------------------------------
def han_layer(h, adj, Waug, sw1, sb1, sw2t, *, num_heads, out_feats,
              out_w=None, out_b=None, out_dtype=jnp.bfloat16):
    P, N, _ = adj.shape
    Fin = h.shape[1]
    H = num_heads
    D = H * out_feats
    Daug = Waug.shape[-1]
    SH = sw1.shape[1]
    assert N % TILE == 0, "N must be a multiple of TILE"
    T = N // TILE

    # ---- pass 1: projection ------------------------------------------------
    wh, sc = pl.pallas_call(
        functools.partial(_proj_kernel, d_model=D),
        grid=(P, T),
        in_specs=[
            pl.BlockSpec((TILE, Fin), lambda p, t: (t, 0)),
            pl.BlockSpec((None, Fin, Daug), lambda p, t: (p, 0, 0)),
        ],
        out_specs=[
            pl.BlockSpec((None, TILE, D), lambda p, t: (p, t, 0)),
            pl.BlockSpec((None, TILE, 2 * H), lambda p, t: (p, t, 0)),
        ],
        out_shape=[
            jax.ShapeDtypeStruct((P, N, D), jnp.bfloat16),
            jax.ShapeDtypeStruct((P, N, 2 * H), jnp.float32),
        ],
        compiler_params=_compiler_params(("parallel", "parallel")),
    )(h, Waug)

    # Lane-major copy of the (tiny, P*2H*N element) source scores so the GAT kernel
    # broadcasts them along lanes without any in-kernel transpose.
    scT = jnp.transpose(sc, (0, 2, 1))                       # (P, 2H, N)

    # ---- pass 2: GAT, tiled over destination rows ---------------------------
    z, tsum = pl.pallas_call(
        functools.partial(_gat_kernel, num_heads=H, out_feats=out_feats),
        grid=(P, T),
        in_specs=[
            pl.BlockSpec((None, TILE, N), lambda p, t: (p, t, 0)),      # adj rows (int8)
            pl.BlockSpec((None, N, D), lambda p, t: (p, 0, 0)),         # Wh all src (revisited)
            pl.BlockSpec((None, 2 * H, N), lambda p, t: (p, 0, 0)),     # el scores, lane-major
            pl.BlockSpec((None, TILE, 2 * H), lambda p, t: (p, t, 0)),  # dst-tile scores
            pl.BlockSpec((D, SH), lambda p, t: (0, 0)),                 # sw1
            pl.BlockSpec((1, SH), lambda p, t: (0, 0)),                 # sb1
        ],
        out_specs=[
            pl.BlockSpec((None, TILE, D), lambda p, t: (p, t, 0)),
            pl.BlockSpec((None, 1, SH), lambda p, t: (p, 0, 0)),        # accumulator over t
        ],
        out_shape=[
            jax.ShapeDtypeStruct((P, N, D), jnp.bfloat16),
            jax.ShapeDtypeStruct((P, 1, SH), jnp.float32),
        ],
        compiler_params=_compiler_params(("parallel", "arbitrary")),
    )(adj, wh, scT, sc, sw1, sb1)

    # ---- pass 3: semantic softmax + combine (+ fused output Linear) ---------
    apply_linear = out_w is not None
    extra_in, extra_specs = [], []
    out_dim = D
    if apply_linear:
        out_dim = out_w.shape[1]
        extra_in = [out_w, out_b]
        extra_specs = [
            pl.BlockSpec((D, out_dim), lambda t: (0, 0)),
            pl.BlockSpec((1, out_dim), lambda t: (0, 0)),
        ]

    out = pl.pallas_call(
        functools.partial(_combine_kernel, inv_n=1.0 / N, apply_linear=apply_linear),
        grid=(T,),
        in_specs=[
            pl.BlockSpec((P, TILE, D), lambda t: (0, t, 0)),
            pl.BlockSpec((P, 1, SH), lambda t: (0, 0, 0)),
            pl.BlockSpec((1, SH), lambda t: (0, 0)),
        ] + extra_specs,
        out_specs=pl.BlockSpec((TILE, out_dim), lambda t: (t, 0)),
        out_shape=jax.ShapeDtypeStruct((N, out_dim), out_dtype),
        compiler_params=_compiler_params(("parallel",)),
    )(z, tsum, sw2t, *extra_in)
    return out


# ----------------------------------------------------------------------------
# Parameters (shapes follow the PyTorch __init__) + one-time preparation
# ----------------------------------------------------------------------------
def _uniform(key, shape, scale):
    return jax.random.uniform(key, shape, jnp.float32, -scale, scale)


def init_han_params(key, num_meta_paths, in_size, hidden_size, out_size,
                    num_heads, sem_hidden=128):
    params = {"layers": []}
    dim_in = in_size
    for H in num_heads:
        key, k1, k2, k3, k4, k5, k6 = jax.random.split(key, 7)
        D = hidden_size * H
        params["layers"].append(dict(
            W=_uniform(k1, (num_meta_paths, dim_in, D), 1.0 / math.sqrt(dim_in)),
            al=_uniform(k2, (num_meta_paths, H, hidden_size), 0.5),
            ar=_uniform(k3, (num_meta_paths, H, hidden_size), 0.5),
            sw1=_uniform(k4, (D, sem_hidden), 1.0 / math.sqrt(D)),
            sb1=_uniform(k5, (1, sem_hidden), 1.0 / math.sqrt(D)),
            sw2=_uniform(k6, (sem_hidden, 1), 1.0 / math.sqrt(sem_hidden)),
        ))
        dim_in = D
    key, k1, k2 = jax.random.split(key, 3)
    params["out_w"] = _uniform(k1, (dim_in, out_size), 1.0 / math.sqrt(dim_in))
    params["out_b"] = _uniform(k2, (1, out_size), 1.0 / math.sqrt(dim_in))
    return params


def prepare_params(params):
    """Fold the GAT attention vectors into the projection matmul and cast weights to bf16."""
    prepped = {"layers": []}
    for layer in params["layers"]:
        W, al, ar = layer["W"], layer["al"], layer["ar"]
        P, Fin, D = W.shape
        H, Fout = al.shape[1], al.shape[2]
        W4 = W.reshape(P, Fin, H, Fout)
        A_l = jnp.einsum("pfhd,phd->pfh", W4, al)          # el = h @ A_l  (source score)
        A_r = jnp.einsum("pfhd,phd->pfh", W4, ar)          # er = h @ A_r  (destination score)
        Waug = jnp.concatenate([W, A_l, A_r], axis=-1).astype(jnp.bfloat16)
        prepped["layers"].append(dict(
            Waug=Waug,
            sw1=layer["sw1"].astype(jnp.bfloat16),
            sb1=layer["sb1"],
            sw2t=jnp.transpose(layer["sw2"]),              # (1, SH)
            num_heads=H,
            out_feats=Fout,
        ))
    prepped["out_w"] = params["out_w"].astype(jnp.bfloat16)
    prepped["out_b"] = params["out_b"]
    return prepped


def han_forward(prepped, h, adj):
    x = h.astype(jnp.bfloat16)
    layers = prepped["layers"]
    for li, layer in enumerate(layers):
        last = li == len(layers) - 1
        x = han_layer(
            x, adj, layer["Waug"], layer["sw1"], layer["sb1"], layer["sw2t"],
            num_heads=layer["num_heads"], out_feats=layer["out_feats"],
            out_w=prepped["out_w"] if last else None,
            out_b=prepped["out_b"] if last else None,
            out_dtype=jnp.float32 if last else jnp.bfloat16,
        )
    return x


# ----------------------------------------------------------------------------
if __name__ == "__main__":
    # TODO(synk): DGL graph construction (metapath_reachable_graph / the 2-hop edge join with
    # 'sta'/'stb' edge features for the custom GATConv `new=True` path) has no Pallas
    # equivalent; metapath graphs are supplied as dense int8 adjacency matrices (with
    # self-loops) and dropout is a no-op (eval mode). Large sparse graphs would use CSR +
    # PrefetchScalarGridSpec instead of dense adjacency.
    key = jax.random.PRNGKey(0)
    N, P = 256, 2                                   # nodes (multiple of TILE), metapaths
    in_size, hidden_size, out_size = 128, 128, 128  # lane-dense feature widths
    num_heads = (2, 2)

    k_h, k_adj, k_p = jax.random.split(key, 3)
    h = jax.random.normal(k_h, (N, in_size), jnp.float32)
    adj_bool = jax.random.uniform(k_adj, (P, N, N)) < 0.15
    adj_bool = jnp.logical_or(adj_bool, jnp.eye(N, dtype=bool)[None])   # self-loops (required)
    adj = adj_bool.astype(jnp.int8)
    # invariant the kernel relies on (no all-masked destination rows):
    assert bool(jnp.all(jnp.diagonal(adj, axis1=1, axis2=2) > 0))

    params = init_han_params(k_p, P, in_size, hidden_size, out_size, num_heads)
    prepped = prepare_params(params)

    out = jax.block_until_ready(han_forward(prepped, h, adj))
    assert out.shape == (N, out_size) and out.dtype == jnp.float32
    assert bool(jnp.all(jnp.isfinite(out)))
    print("KERNEL_OK")
</pallas_src>

<mosaic_0001>
module attributes {stable_mosaic.version = 11 : i64} {
  func.func @_proj_kernel(%arg0: i32, %arg1: i32, %arg2: memref<128x128xbf16, #tpu.memory_space<vmem>>, %arg3: memref<1x128x260xbf16, #tpu.memory_space<vmem>>, %arg4: memref<1x128x256xbf16, #tpu.memory_space<vmem>>, %arg5: memref<1x128x4xf32, #tpu.memory_space<vmem>>) attributes {dimension_semantics = [#tpu.dimension_semantics<parallel>, #tpu.dimension_semantics<parallel>], iteration_bounds = array<i64: 2, 2>, scalar_prefetch = 0 : i64, scratch_operands = 0 : i64, tpu.core_type = #tpu.core_type<tc>, window_params = [{transform_indices = @transform_0, window_bounds = array<i64: 128, 128>}, {transform_indices = @transform_1, window_bounds = array<i64: 1, 128, 260>}, {transform_indices = @transform_2, window_bounds = array<i64: 1, 128, 256>}, {transform_indices = @transform_3, window_bounds = array<i64: 1, 128, 4>}]} {
    %c0 = arith.constant 0 : index
    %c0_0 = arith.constant 0 : index
    %0 = vector.load %arg2[%c0, %c0_0] : memref<128x128xbf16, #tpu.memory_space<vmem>>, vector<128x128xbf16>
    %c0_1 = arith.constant 0 : index
    %c0_2 = arith.constant 0 : index
    %c0_3 = arith.constant 0 : index
    %1 = vector.load %arg3[%c0_1, %c0_2, %c0_3] : memref<1x128x260xbf16, #tpu.memory_space<vmem>>, vector<1x128x260xbf16>
    %2 = vector.shape_cast %1 : vector<1x128x260xbf16> to vector<128x260xbf16>
    %cst = arith.constant dense<0.000000e+00> : vector<128x260xf32>
    %3 = tpu.matmul %0, %2, %cst {dimension_numbers = #tpu.dot_dimension_numbers<[1], [0], [0], [1], [0, 0, 1, 1], [], []>} : vector<128x128xbf16>, vector<128x260xbf16>, vector<128x260xf32> -> vector<128x260xf32>
    %4 = vector.extract_strided_slice %3 {offsets = [0, 0], sizes = [128, 256], strides = [1, 1]} : vector<128x260xf32> to vector<128x256xf32>
    %5 = arith.truncf %4 : vector<128x256xf32> to vector<128x256xbf16>
    %c0_4 = arith.constant 0 : index
    %c0_5 = arith.constant 0 : index
    %c0_6 = arith.constant 0 : index
    %6 = vector.load %arg4[%c0_4, %c0_5, %c0_6] : memref<1x128x256xbf16, #tpu.memory_space<vmem>>, vector<1x128x256xbf16>
    %7 = vector.shape_cast %6 : vector<1x128x256xbf16> to vector<128x256xbf16>
    %8 = vector.shape_cast %5 : vector<128x256xbf16> to vector<1x128x256xbf16>
    tpu.vector_store %arg4[%c0_4, %c0_5, %c0_6], %8 {strides = array<i32>} : memref<1x128x256xbf16, #tpu.memory_space<vmem>>, vector<1x128x256xbf16>,
    %9 = vector.extract_strided_slice %3 {offsets = [0, 256], sizes = [128, 4], strides = [1, 1]} : vector<128x260xf32> to vector<128x4xf32>
    %c0_7 = arith.constant 0 : index
    %c0_8 = arith.constant 0 : index
    %c0_9 = arith.constant 0 : index
    %10 = vector.load %arg5[%c0_7, %c0_8, %c0_9] : memref<1x128x4xf32, #tpu.memory_space<vmem>>, vector<1x128x4xf32>
    %11 = vector.shape_cast %10 : vector<1x128x4xf32> to vector<128x4xf32>
    %12 = vector.shape_cast %9 : vector<128x4xf32> to vector<1x128x4xf32>
    tpu.vector_store %arg5[%c0_7, %c0_8, %c0_9], %12 {strides = array<i32>} : memref<1x128x4xf32, #tpu.memory_space<vmem>>, vector<1x128x4xf32>,
    return
  }
  func.func @transform_0(%arg0: i32, %arg1: i32) -> (i32, i32) {
    %c0_i32 = arith.constant 0 : i32
    %c0_i32_0 = arith.constant 0 : i32
    return %arg1, %c0_i32 : i32, i32
  }
  func.func @transform_1(%arg0: i32, %arg1: i32) -> (i32, i32, i32) {
    %c0_i32 = arith.constant 0 : i32
    %c0_i32_0 = arith.constant 0 : i32
    %c0_i32_1 = arith.constant 0 : i32
    return %arg0, %c0_i32, %c0_i32_0 : i32, i32, i32
  }
  func.func @transform_2(%arg0: i32, %arg1: i32) -> (i32, i32, i32) {
    %c0_i32 = arith.constant 0 : i32
    %c0_i32_0 = arith.constant 0 : i32
    return %arg0, %arg1, %c0_i32 : i32, i32, i32
  }
  func.func @transform_3(%arg0: i32, %arg1: i32) -> (i32, i32, i32) {
    %c0_i32 = arith.constant 0 : i32
    %c0_i32_0 = arith.constant 0 : i32
    return %arg0, %arg1, %c0_i32 : i32, i32, i32
  }
}

</mosaic_0001>

<llo_original>
// kernel: tpu_custom_call.1
$region0: #{tpu_custom_call.1}
  #allocation0 [shape = 'u32[]', space=smem, size = 0x4, offset = 0x4, fixed_abs, tag = 'smem constant byte address 0x4 - core index']
  #allocation1 [shape = 'u32[144,128]{1,0:T(1,128)}', space=vmem, size = 0x12000, scoped, tag = 'internal scratch']
  %s0 = inlined_call_operand.vmem [shape: bf16[256,128], index: 0, kind: input, shape index: {}]
  %s1 = inlined_call_operand.vmem [shape: bf16[2,128,260], index: 1, kind: input, shape index: {}]
  %s2 = inlined_call_operand.hbm [shape: bf16[2,256,256], index: 2, kind: output, shape index: {0}]
  %s3 = inlined_call_operand.vmem [shape: f32[2,256,4], index: 3, kind: output, shape index: {1}]
  %4 = xla_tuple %s2, %s3
  %s5 = sld [smem:[#allocation0]]
  $region49: #{tpu_custom_call.1} parent=0
    _
  %s7 = ssub.s32 1, %s5
  %s8 = scalar_select 0, %s7, %s5
  $region1: #{tpu_custom_call.1} parent=0
    #allocation2 [shape = 'u8[131072]{0}', space=vmem, size = 0x20000, scoped, tag = 'output window, operand 0']
    #allocation3 [shape = 's32[2]{0}', space=sflag, size = 0x8, scoped, tag = 'scoped memory for tpu_custom_call.1']
    %9 = vsyncpa [#allocation3], 0
    %s10 = scalar_lea.sflag [#allocation3], 1
    %11 = vsyncpa %s10, 0
    loop: start=0, step=1, limit=6
    $region2: #{tpu_custom_call.1} parent=1 // loop_pre_header
      _
    $region3: #{tpu_custom_call.1} parent=1 // loop_header
      %s13 = sphi 0, %s17
      %p14 = scmp.ge.s32.totalorder %s13, 6
      %s20 = sphi 0, %s32
      %s21 = sphi 0, %s28
      %s22 = sphi 0, %s20
      %s23 = sphi 0, %s21
      %s24 = sphi 0, %s22
      %s25 = sphi 0, %s23
      %s35 = sphi 0, %s37
      %s38 = sphi 0, %s35
      %s39 = sphi 0, %s38
      %s55 = sphi 0, %s39
      %s61 = sphi 0, %s63
      %s64 = sphi 0, %s61
      %s65 = sphi 0, %s64
      %s81 = sphi 0, %s65
      %s89 = sphi 0, %s91
      %s92 = sphi 0, %s89
      %s93 = sphi 0, %s92
      %s109 = sphi 0, %s93
      %s117 = sphi 0, %s119
      %s120 = sphi 0, %s117
      %s121 = sphi 0, %s120
      %s137 = sphi 0, %s121
    $region4: #{tpu_custom_call.1} parent=1 // loop_header_branch
      %16 = sbr.rel (%p14) target = $region8
    $region5: #{tpu_custom_call.1} parent=1 // loop_body
      %s18 = ssub.s32 %s13, 1
      %s19 = ssub.s32 %s13, 2
      %s26 = sadd.s32 1, %s21
      %p27 = scmp.ge.s32.totalorder %s26, 2
      %s28 = scalar_select %p27, 0, %s26
      %s29 = sadd.s32 1, %s20
      %s30 = scalar_select %p27, %s29, %s20
      %p31 = scmp.ge.s32.totalorder %s30, 2
      %s32 = scalar_select %p31, 0, %s30
      %s33 = ssub.s32 %s21, %s28
      %p34 = scmp.eq.s32.totalorder %s33, 0
      %s36 = sadd.s32 %s35, 1
      %s37 = scalar_select %p34, %s35, %s36
      %p40 = pneg %p34
      %p41 = scmp.eq.s32.totalorder %s13, 3
      %p42 = por %p40, %p41
      %p43 = scmp.ne.s32.totalorder %s35, %s38
      %p44 = scmp.eq.s32.totalorder %s13, 0
      %p45 = por %p43, %p44
      %p46 = scmp.ne.s32.totalorder %s35, %s38
      %p47 = scmp.eq.s32.totalorder %s18, 3
      %p48 = por %p46, %p47
      %p49 = scmp.ne.s32.totalorder %s38, %s39
      %p50 = scmp.eq.s32.totalorder %s18, 0
      %p51 = por %p49, %p50
      %p52 = scmp.ne.s32.totalorder %s38, %s39
      %p53 = scmp.eq.s32.totalorder %s19, 3
      %p54 = por %p52, %p53
      %p56 = scmp.ne.s32.totalorder %s39, %s55
      %p57 = scmp.eq.s32.totalorder %s19, 0
      %p58 = por %p56, %p57
      %s59 = ssub.s32 %s20, %s32
      %p60 = scmp.eq.s32.totalorder %s59, 0
      %s62 = sadd.s32 %s61, 1
      %s63 = scalar_select %p60, %s61, %s62
      %p66 = pneg %p60
      %p67 = scmp.eq.s32.totalorder %s13, 3
      %p68 = por %p66, %p67
      %p69 = scmp.ne.s32.totalorder %s61, %s64
      %p70 = scmp.eq.s32.totalorder %s13, 0
      %p71 = por %p69, %p70
      %p72 = scmp.ne.s32.totalorder %s61, %s64
      %p73 = scmp.eq.s32.totalorder %s18, 3
      %p74 = por %p72, %p73
      %p75 = scmp.ne.s32.totalorder %s64, %s65
      %p76 = scmp.eq.s32.totalorder %s18, 0
      %p77 = por %p75, %p76
      %p78 = scmp.ne.s32.totalorder %s64, %s65
      %p79 = scmp.eq.s32.totalorder %s19, 3
      %p80 = por %p78, %p79
      %p82 = scmp.ne.s32.totalorder %s65, %s81
      %p83 = scmp.eq.s32.totalorder %s19, 0
      %p84 = por %p82, %p83
      %s85 = ssub.s32 %s20, %s32
      %s86 = ssub.s32 %s21, %s28
      %s87 = sor.u32 %s85, %s86
      %p88 = scmp.eq.s32.totalorder %s87, 0
      %s90 = sadd.s32 %s89, 1
      %s91 = scalar_select %p88, %s89, %s90
      %p94 = pneg %p88
      %p95 = scmp.eq.s32.totalorder %s13, 3
      %p96 = por %p94, %p95
      %p97 = scmp.ne.s32.totalorder %s89, %s92
      %p98 = scmp.eq.s32.totalorder %s13, 0
      %p99 = por %p97, %p98
      %p100 = scmp.ne.s32.totalorder %s89, %s92
      %p101 = scmp.eq.s32.totalorder %s18, 3
      %p102 = por %p100, %p101
      %p103 = scmp.ne.s32.totalorder %s92, %s93
      %p104 = scmp.eq.s32.totalorder %s18, 0
      %p105 = por %p103, %p104
      %p106 = scmp.ne.s32.totalorder %s92, %s93
      %p107 = scmp.eq.s32.totalorder %s19, 3
      %p108 = por %p106, %p107
      %p110 = scmp.ne.s32.totalorder %s93, %s109
      %p111 = scmp.eq.s32.totalorder %s19, 0
      %p112 = por %p110, %p111
      %s113 = ssub.s32 %s20, %s32
      %s114 = ssub.s32 %s21, %s28
      %s115 = sor.u32 %s113, %s114
      %p116 = scmp.eq.s32.totalorder %s115, 0
      %s118 = sadd.s32 %s117, 1
      %s119 = scalar_select %p116, %s117, %s118
      %p122 = pneg %p116
      %p123 = scmp.eq.s32.totalorder %s13, 3
      %p124 = por %p122, %p123
      %p125 = scmp.ne.s32.totalorder %s117, %s120
      %p126 = scmp.eq.s32.totalorder %s13, 0
      %p127 = por %p125, %p126
      %p128 = scmp.ne.s32.totalorder %s117, %s120
      %p129 = scmp.eq.s32.totalorder %s18, 3
      %p130 = por %p128, %p129
      %p131 = scmp.ne.s32.totalorder %s120, %s121
      %p132 = scmp.eq.s32.totalorder %s18, 0
      %p133 = por %p131, %p132
      %p134 = scmp.ne.s32.totalorder %s120, %s121
      %p135 = scmp.eq.s32.totalorder %s19, 3
      %p136 = por %p134, %p135
      %p138 = scmp.ne.s32.totalorder %s121, %s137
      %p139 = scmp.eq.s32.totalorder %s19, 0
      %p140 = por %p138, %p139
      %p141 = scmp.le.s32.totalorder 1, %s13
      %p142 = scmp.lt.s32.totalorder %s13, 5
      %p143 = pnand %p141, %p142
      %p144 = pneg %p143
      // Predicated region
      $region9: #{tpu_custom_call.1} parent=5 // pred_check
        _
      $region10: #{tpu_custom_call.1} parent=5 // pred_check_branch
        %146 = sbr.rel (%p143) target = $region12
      $region11: #{tpu_custom_call.1} parent=5 // pred_region
        %s147 = ssub.s32 %s13, 1
      $region12: #{tpu_custom_call.1} parent=5 // pred_fallthru
        _
      %p148 = scmp.lt.s32.totalorder %s13, 4
      // Predicated region
      $region13: #{tpu_custom_call.1} parent=5 // pred_check
        %p149 = pneg %p148
      $region14: #{tpu_custom_call.1} parent=5 // pred_check_branch
        %151 = sbr.rel (%p149) target = $region16
      $region15: #{tpu_custom_call.1} parent=5 // pred_region
        // Predicated region
        $region17: #{tpu_custom_call.1} parent=15 // pred_check
          %p152 = pneg %p45
        $region18: #{tpu_custom_call.1} parent=15 // pred_check_branch
          %154 = sbr.rel (%p152) target = $region20
        $region19: #{tpu_custom_call.1} parent=15 // pred_region
          %s155 = smul.u32 16, %s21
          %p156 = scmp.lt.s32.totalorder %s155, 31
          %s157 = scalar_select %p156, %s155, 31
          %s158 = smul.addr %s157, 4
          %s159 = scalar_lea.vmem %s0, %s158
          %s160 = smul.u32 16, %s21
        $region20: #{tpu_custom_call.1} parent=15 // pred_fallthru
          _
        // Predicated region
        $region21: #{tpu_custom_call.1} parent=15 // pred_check
          %p161 = pneg %p71
        $region22: #{tpu_custom_call.1} parent=15 // pred_check_branch
          %163 = sbr.rel (%p161) target = $region24
        $region23: #{tpu_custom_call.1} parent=15 // pred_region
          %p164 = scmp.lt.s32.totalorder %s20, 1
          %s165 = scalar_select %p164, %s20, 1
          %s166 = smul.addr %s165, 48
          %s167 = smul.addr %s166, 4
          %s168 = scalar_lea.vmem %s1, %s167
        $region24: #{tpu_custom_call.1} parent=15 // pred_fallthru
          _
      $region16: #{tpu_custom_call.1} parent=5 // pred_fallthru
        _
      %p169 = scmp.le.s32.totalorder 1, %s13
      %p170 = scmp.lt.s32.totalorder %s13, 5
      %p171 = pnand %p169, %p170
      %p172 = pneg %p171
      // Predicated region
      $region25: #{tpu_custom_call.1} parent=5 // pred_check
        _
      $region26: #{tpu_custom_call.1} parent=5 // pred_check_branch
        %174 = sbr.rel (%p171) target = $region28
      $region27: #{tpu_custom_call.1} parent=5 // pred_region
        %s175 = ssub.s32 %s13, 1
        %s176 = smul.u32 16, %s23
        %p177 = scmp.lt.s32.totalorder %s176, 31
        %s178 = scalar_select %p177, %s176, 31
        %s179 = smul.addr %s178, 4
        %s180 = scalar_lea.vmem %s0, %s179
        %p181 = pneg %p51
        %p182 = pneg %p48
        %p183 = scmp.lt.s32.totalorder %s22, 1
        %s184 = scalar_select %p183, %s22, 1
        %s185 = smul.addr %s184, 48
        %s186 = smul.addr %s185, 4
        %s187 = scalar_lea.vmem %s1, %s186
        %p188 = pneg %p77
        %p189 = pneg %p74
        %p190 = pneg %p105
        %p191 = pneg %p102
        %s192 = sand.u32 %s92, 1
        %s193 = scalar_lea.sflag [#allocation3], %s192
        %s194 = sand.u32 %s92, 1
        %s195 = smul.addr %s194, 128
        %s196 = scalar_lea.vmem [#allocation2], %s195
        %p197 = pneg %p133
        %p198 = pneg %p130
        %s199 = smul.u32 16, %s23
        %p200 = scmp.lt.s32.totalorder %s22, 1
        %s201 = scalar_select %p200, %s22, 1
        %p202 = scmp.lt.s32.totalorder %s199, 31
        %s203 = scalar_select %p202, %s199, 31
        %s204 = smul.addr %s201, 32
        %s205 = sadd.s32 %s203, %s204
        %s206 = smul.addr %s205, 8
        %s207 = scalar_lea.vmem %s3, %s206
        %s208 = smul.u32 16, %s23
        %p209 = scmp.lt.s32.totalorder %s208, 31
        %s210 = scalar_select %p209, %s208, 31
        %s211 = smul.addr %s210, 4
        %s212 = scalar_lea.vmem %s0, %s211
        %s213 = smul.u32 16, %s23
        %p214 = scmp.lt.s32.totalorder %s22, 1
        %s215 = scalar_select %p214, %s22, 1
        %s216 = smul.addr %s215, 48
        %s217 = smul.addr %s216, 4
        %s218 = scalar_lea.vmem %s1, %s217
        %s219 = smul.u32 16, %s23
        %s220 = smul.u32 16, %s23
        %p221 = scmp.lt.s32.totalorder %s22, 1
        %s222 = scalar_select %p221, %s22, 1
        %p223 = scmp.lt.s32.totalorder %s220, 31
        %s224 = scalar_select %p223, %s220, 31
        %s225 = smul.addr %s222, 32
        %s226 = sadd.s32 %s224, %s225
        %s227 = smul.addr %s226, 8
        %s228 = scalar_lea.vmem %s3, %s227
        %s229 = smul.u32 16, %s23
        %v231 = vld [vmem:[%s212] sm:$0xf]
        %v232 = vld [vmem:[%s212 + $0x4] sm:$0xf]
        %v233 = vld [vmem:[%s212 + $0x8] sm:$0xf]
        %v234 = vld [vmem:[%s212 + $0xc] sm:$0xf]
        %v235 = vld [vmem:[%s212 + $0x10] sm:$0xf]
        %v236 = vld [vmem:[%s212 + $0x14] sm:$0xf]
        %v237 = vld [vmem:[%s212 + $0x18] sm:$0xf]
        %v238 = vld [vmem:[%s212 + $0x1c] sm:$0xf]
        %v239 = vld [vmem:[%s212 + $0x20] sm:$0xf]
        %v240 = vld [vmem:[%s212 + $0x24] sm:$0xf]
        %v241 = vld [vmem:[%s212 + $0x28] sm:$0xf]
        %v242 = vld [vmem:[%s212 + $0x2c] sm:$0xf]
        %v243 = vld [vmem:[%s212 + $0x30] sm:$0xf]
        %v244 = vld [vmem:[%s212 + $0x34] sm:$0xf]
        %v245 = vld [vmem:[%s212 + $0x38] sm:$0xf]
        %v246 = vld [vmem:[%s212 + $0x3c] sm:$0xf]
        %v247 = vld [vmem:[%s218] sm:$0xff]
        %v248 = vld [vmem:[%s218 + $0x8] sm:$0xf]
        %v249 = vld [vmem:[%s218 + $0xc] sm:$0xff]
        %v250 = vld [vmem:[%s218 + $0x14] sm:$0xf]
        %v251 = vld [vmem:[%s218 + $0x18] sm:$0xff]
        %v252 = vld [vmem:[%s218 + $0x20] sm:$0xf]
        %v253 = vld [vmem:[%s218 + $0x24] sm:$0xff]
        %v254 = vld [vmem:[%s218 + $0x2c] sm:$0xf]
        %v255 = vld [vmem:[%s218 + $0x30] sm:$0xff]
        %v256 = vld [vmem:[%s218 + $0x38] sm:$0xf]
        %v257 = vld [vmem:[%s218 + $0x3c] sm:$0xff]
        %v258 = vld [vmem:[%s218 + $0x44] sm:$0xf]
        %v259 = vld [vmem:[%s218 + $0x48] sm:$0xff]
        %v260 = vld [vmem:[%s218 + $0x50] sm:$0xf]
        %v261 = vld [vmem:[%s218 + $0x54] sm:$0xff]
        %v262 = vld [vmem:[%s218 + $0x5c] sm:$0xf]
        %v263 = vld [vmem:[%s218 + $0x60] sm:$0xff]
        %v264 = vld [vmem:[%s218 + $0x68] sm:$0xf]
        %v265 = vld [vmem:[%s218 + $0x6c] sm:$0xff]
        %v266 = vld [vmem:[%s218 + $0x74] sm:$0xf]
        %v267 = vld [vmem:[%s218 + $0x78] sm:$0xff]
        %v268 = vld [vmem:[%s218 + $0x80] sm:$0xf]
        %v269 = vld [vmem:[%s218 + $0x84] sm:$0xff]
        %v270 = vld [vmem:[%s218 + $0x8c] sm:$0xf]
        %v271 = vld [vmem:[%s218 + $0x90] sm:$0xff]
        %v272 = vld [vmem:[%s218 + $0x98] sm:$0xf]
        %v273 = vld [vmem:[%s218 + $0x9c] sm:$0xff]
        %v274 = vld [vmem:[%s218 + $0xa4] sm:$0xf]
        %v275 = vld [vmem:[%s218 + $0xa8] sm:$0xff]
        %v276 = vld [vmem:[%s218 + $0xb0] sm:$0xf]
        %v277 = vld [vmem:[%s218 + $0xb4] sm:$0xff]
        %v278 = vld [vmem:[%s218 + $0xbc] sm:$0xf]
        %v295 = vunpack.c.l.b16 %v231
        %v296 = vunpack.c.l.b16 %v232
        %v297 = vunpack.c.l.b16 %v233
        %v298 = vunpack.c.l.b16 %v234
        %v299 = vunpack.c.l.b16 %v235
        %v300 = vunpack.c.l.b16 %v236
        %v301 = vunpack.c.l.b16 %v237
        %v302 = vunpack.c.l.b16 %v238
        %v303 = vunpack.c.l.b16 %v239
        %v304 = vunpack.c.l.b16 %v240
        %v305 = vunpack.c.l.b16 %v241
        %v306 = vunpack.c.l.b16 %v242
        %v307 = vunpack.c.l.b16 %v243
        %v308 = vunpack.c.l.b16 %v244
        %v309 = vunpack.c.l.b16 %v245
        %v310 = vunpack.c.l.b16 %v246
        %v311 = vpack.c.b16 %v296, %v295
        %v312 = vpack.c.b16 %v298, %v297
        %v313 = vpack.c.b16 %v300, %v299
        %v314 = vpack.c.b16 %v302, %v301
        %v315 = vpack.c.b16 %v304, %v303
        %v316 = vpack.c.b16 %v306, %v305
        %v317 = vpack.c.b16 %v308, %v307
        %v318 = vpack.c.b16 %v310, %v309
        %v359 = vunpack.c.l.b16 %v247
        %v360 = vunpack.c.h.b16 %v247
        %v361 = vunpack.c.l.b16 %v248
        %v362 = vunpack.c.l.b16 %v249
        %v363 = vunpack.c.h.b16 %v249
        %v364 = vunpack.c.l.b16 %v250
        %v365 = vunpack.c.l.b16 %v251
        %v366 = vunpack.c.h.b16 %v251
        %v367 = vunpack.c.l.b16 %v252
        %v368 = vunpack.c.l.b16 %v253
        %v369 = vunpack.c.h.b16 %v253
        %v370 = vunpack.c.l.b16 %v254
        %v371 = vunpack.c.l.b16 %v255
        %v372 = vunpack.c.h.b16 %v255
        %v373 = vunpack.c.l.b16 %v256
        %v374 = vunpack.c.l.b16 %v257
        %v375 = vunpack.c.h.b16 %v257
        %v376 = vunpack.c.l.b16 %v258
        %v377 = vunpack.c.l.b16 %v259
        %v378 = vunpack.c.h.b16 %v259
        %v379 = vunpack.c.l.b16 %v260
        %v380 = vunpack.c.l.b16 %v261
        %v381 = vunpack.c.h.b16 %v261
        %v382 = vunpack.c.l.b16 %v262
        %v383 = vunpack.c.l.b16 %v263
        %v384 = vunpack.c.h.b16 %v263
        %v385 = vunpack.c.l.b16 %v264
        %v386 = vunpack.c.l.b16 %v265
        %v387 = vunpack.c.h.b16 %v265
        %v388 = vunpack.c.l.b16 %v266
        %v389 = vunpack.c.l.b16 %v267
        %v390 = vunpack.c.h.b16 %v267
        %v391 = vunpack.c.l.b16 %v268
        %v392 = vunpack.c.l.b16 %v269
        %v393 = vunpack.c.h.b16 %v269
        %v394 = vunpack.c.l.b16 %v270
        %v395 = vunpack.c.l.b16 %v271
        %v396 = vunpack.c.h.b16 %v271
        %v397 = vunpack.c.l.b16 %v272
        %v398 = vunpack.c.l.b16 %v273
        %v399 = vunpack.c.h.b16 %v273
        %v400 = vunpack.c.l.b16 %v274
        %v401 = vunpack.c.l.b16 %v275
        %v402 = vunpack.c.h.b16 %v275
        %v403 = vunpack.c.l.b16 %v276
        %v404 = vunpack.c.l.b16 %v277
        %v405 = vunpack.c.h.b16 %v277
        %v406 = vunpack.c.l.b16 %v278
        %v407 = vpack.c.b16 %v362, %v359
        %v408 = vpack.c.b16 %v363, %v360
        %v409 = vpack.c.b16 %v364, %v361
        %v410 = vpack.c.b16 %v368, %v365
        %v411 = vpack.c.b16 %v369, %v366
        %v412 = vpack.c.b16 %v370, %v367
        %v413 = vpack.c.b16 %v374, %v371
        %v414 = vpack.c.b16 %v375, %v372
        %v415 = vpack.c.b16 %v376, %v373
        %v416 = vpack.c.b16 %v380, %v377
        %v417 = vpack.c.b16 %v381, %v378
        %v418 = vpack.c.b16 %v382, %v379
        %v419 = vpack.c.b16 %v386, %v383
        %v420 = vpack.c.b16 %v387, %v384
        %v421 = vpack.c.b16 %v388, %v385
        %v422 = vpack.c.b16 %v392, %v389
        %v423 = vpack.c.b16 %v393, %v390
        %v424 = vpack.c.b16 %v394, %v391
        %v425 = vpack.c.b16 %v398, %v395
        %v426 = vpack.c.b16 %v399, %v396
        %v427 = vpack.c.b16 %v400, %v397
        %v428 = vpack.c.b16 %v404, %v401
        %v429 = vpack.c.b16 %v405, %v402
        %v430 = vpack.c.b16 %v406, %v403
        %455 = vmatprep.subr.bf16.mxu0 %v408
        %456 = vmatpush1.bf16.msra.mxu0 %v407
        %457 = vmatprep.subr.bf16.mxu0 %v411
        %458 = vmatpush1.bf16.msra.mxu0 %v410
        %459 = vmatprep.subr.bf16.mxu0 %v414
        %460 = vmatpush1.bf16.msra.mxu0 %v413
        %461 = vmatprep.subr.bf16.mxu0 %v417
        %462 = vmatpush1.bf16.msra.mxu0 %v416
        %463 = vmatprep.subr.bf16.mxu0 %v420
        %464 = vmatpush1.bf16.msra.mxu0 %v419
        %465 = vmatprep.subr.bf16.mxu0 %v423
        %466 = vmatpush1.bf16.msra.mxu0 %v422
        %467 = vmatprep.subr.bf16.mxu0 %v426
        %468 = vmatpush1.bf16.msra.mxu0 %v425
        %469 = vmatprep.subr.bf16.mxu0 %v429
        %470 = vmatpush1.bf16.msra.mxu0 %v428
        %471 = vmatprep.subr.bf16.mxu0 0
        %472 = vmatpush1.bf16.msra.mxu0 0
        %473 = vmatprep.subr.bf16.mxu0 0
        %474 = vmatpush1.bf16.msra.mxu0 0
        %475 = vmatprep.subr.bf16.mxu0 0
        %476 = vmatpush1.bf16.msra.mxu0 0
        %477 = vmatprep.subr.bf16.mxu0 0
        %478 = vmatpush1.bf16.msra.mxu0 0
        %479 = vmatprep.subr.bf16.mxu0 0
        %480 = vmatpush1.bf16.msra.mxu0 0
        %481 = vmatprep.subr.bf16.mxu0 0
        %482 = vmatpush1.bf16.msra.mxu0 0
        %483 = vmatprep.subr.bf16.mxu0 0
        %484 = vmatpush1.bf16.msra.mxu0 0
        %485 = vmatprep.subr.bf16.mxu0 0
        %486 = vmatpush1.bf16.msra.mxu0 0
        %487 = vmatprep.mubr.bf16.mxu0 0
        %488 = vmatmul.mubr.bf16.gmra.mrb[0].mxu0 %v311
        %v489 = vpop.f32.mrb[0].mxu0
        %v490 = vadd.f32 0.0, %v489
        %v491 = vpop.f32.mrb[0].mxu0
        %v492 = vadd.f32 0.0, %v491
        %v493 = vpop.f32.mrb[0].mxu0
        %v494 = vadd.f32 0.0, %v493
        %v495 = vpop.f32.mrb[0].mxu0
        %v496 = vadd.f32 0.0, %v495
        %497 = vmatprep.mubr.bf16.mxu0 0
        %498 = vmatmul.mubr.bf16.gmra.mrb[0].mxu0 %v312
        %v499 = vpop.f32.mrb[0].mxu0
        %v500 = vadd.f32 0.0, %v499
        %v501 = vpop.f32.mrb[0].mxu0
        %v502 = vadd.f32 0.0, %v501
        %v503 = vpop.f32.mrb[0].mxu0
        %v504 = vadd.f32 0.0, %v503
        %v505 = vpop.f32.mrb[0].mxu0
        %v506 = vadd.f32 0.0, %v505
        %507 = vmatprep.mubr.bf16.mxu0 0
        %508 = vmatmul.mubr.bf16.gmra.mrb[0].mxu0 %v313
        %v509 = vpop.f32.mrb[0].mxu0
        %v510 = vadd.f32 0.0, %v509
        %v511 = vpop.f32.mrb[0].mxu0
        %v512 = vadd.f32 0.0, %v511
        %v513 = vpop.f32.mrb[0].mxu0
        %v514 = vadd.f32 0.0, %v513
        %v515 = vpop.f32.mrb[0].mxu0
        %v516 = vadd.f32 0.0, %v515
        %517 = vmatprep.mubr.bf16.mxu0 0
        %518 = vmatmul.mubr.bf16.gmra.mrb[0].mxu0 %v314
        %v519 = vpop.f32.mrb[0].mxu0
        %v520 = vadd.f32 0.0, %v519
        %v521 = vpop.f32.mrb[0].mxu0
        %v522 = vadd.f32 0.0, %v521
        %v523 = vpop.f32.mrb[0].mxu0
        %v524 = vadd.f32 0.0, %v523
        %v525 = vpop.f32.mrb[0].mxu0
        %v526 = vadd.f32 0.0, %v525
        %527 = vmatprep.mubr.bf16.mxu0 0
        %528 = vmatmul.mubr.bf16.gmra.mrb[0].mxu0 %v315
        %v529 = vpop.f32.mrb[0].mxu0
        %v530 = vadd.f32 0.0, %v529
        %v531 = vpop.f32.mrb[0].mxu0
        %v532 = vadd.f32 0.0, %v531
        %v533 = vpop.f32.mrb[0].mxu0
        %v534 = vadd.f32 0.0, %v533
        %v535 = vpop.f32.mrb[0].mxu0
        %v536 = vadd.f32 0.0, %v535
        %537 = vmatprep.mubr.bf16.mxu0 0
        %538 = vmatmul.mubr.bf16.gmra.mrb[0].mxu0 %v316
        %v539 = vpop.f32.mrb[0].mxu0
        %v540 = vadd.f32 0.0, %v539
        %v541 = vpop.f32.mrb[0].mxu0
        %v542 = vadd.f32 0.0, %v541
        %v543 = vpop.f32.mrb[0].mxu0
        %v544 = vadd.f32 0.0, %v543
        %v545 = vpop.f32.mrb[0].mxu0
        %v546 = vadd.f32 0.0, %v545
        %547 = vmatprep.mubr.bf16.mxu0 0
        %548 = vmatmul.mubr.bf16.gmra.mrb[0].mxu0 %v317
        %v549 = vpop.f32.mrb[0].mxu0
        %v550 = vadd.f32 0.0, %v549
        %v551 = vpop.f32.mrb[0].mxu0
        %v552 = vadd.f32 0.0, %v551
        %v553 = vpop.f32.mrb[0].mxu0
        %v554 = vadd.f32 0.0, %v553
        %v555 = vpop.f32.mrb[0].mxu0
        %v556 = vadd.f32 0.0, %v555
        %557 = vmatprep.mubr.bf16.mxu0 0
        %558 = vmatmul.mubr.bf16.gmra.mrb[0].mxu0 %v318
        %v559 = vpop.f32.mrb[0].mxu0
        %v560 = vadd.f32 0.0, %v559
        %v561 = vpop.f32.mrb[0].mxu0
        %v562 = vadd.f32 0.0, %v561
        %v563 = vpop.f32.mrb[0].mxu0
        %v564 = vadd.f32 0.0, %v563
        %v565 = vpop.f32.mrb[0].mxu0
        %v566 = vadd.f32 0.0, %v565
        %567 = vdwg.mxu0
        %568 = vmatprep.subr.bf16.mxu0 0
        %569 = vmatpush1.bf16.msra.mxu0 %v409
        %570 = vmatprep.subr.bf16.mxu0 0
        %571 = vmatpush1.bf16.msra.mxu0 %v412
        %572 = vmatprep.subr.bf16.mxu0 0
        %573 = vmatpush1.bf16.msra.mxu0 %v415
        %574 = vmatprep.subr.bf16.mxu0 0
        %575 = vmatpush1.bf16.msra.mxu0 %v418
        %576 = vmatprep.subr.bf16.mxu0 0
        %577 = vmatpush1.bf16.msra.mxu0 %v421
        %578 = vmatprep.subr.bf16.mxu0 0
        %579 = vmatpush1.bf16.msra.mxu0 %v424
        %580 = vmatprep.subr.bf16.mxu0 0
        %581 = vmatpush1.bf16.msra.mxu0 %v427
        %582 = vmatprep.subr.bf16.mxu0 0
        %583 = vmatpush1.bf16.msra.mxu0 %v430
        %584 = vmatprep.subr.bf16.mxu0 0
        %585 = vmatpush1.bf16.msra.mxu0 0
        %586 = vmatprep.subr.bf16.mxu0 0
        %587 = vmatpush1.bf16.msra.mxu0 0
        %588 = vmatprep.subr.bf16.mxu0 0
        %589 = vmatpush1.bf16.msra.mxu0 0
        %590 = vmatprep.subr.bf16.mxu0 0
        %591 = vmatpush1.bf16.msra.mxu0 0
        %592 = vmatprep.subr.bf16.mxu0 0
        %593 = vmatpush1.bf16.msra.mxu0 0
        %594 = vmatprep.subr.bf16.mxu0 0
        %595 = vmatpush1.bf16.msra.mxu0 0
        %596 = vmatprep.subr.bf16.mxu0 0
        %597 = vmatpush1.bf16.msra.mxu0 0
        %598 = vmatprep.subr.bf16.mxu0 0
        %599 = vmatpush1.bf16.msra.mxu0 0
        %600 = vmatprep.mubr.bf16.mxu0 0
        %601 = vmatmul.mubr.bf16.gmra.mrb[0].mxu0 %v311
        %v602 = vpop.f32.mrb[0].mxu0
        %v603 = vadd.f32 0.0, %v602
        %v604 = vpop.f32.mrb[0].mxu0
        %v605 = vpop.f32.mrb[0].mxu0
        %v606 = vadd.f32 0.0, %v605
        %v607 = vpop.f32.mrb[0].mxu0
        %608 = vmatprep.mubr.bf16.mxu0 0
        %609 = vmatmul.mubr.bf16.gmra.mrb[0].mxu0 %v312
        %v610 = vpop.f32.mrb[0].mxu0
        %v611 = vadd.f32 0.0, %v610
        %v612 = vpop.f32.mrb[0].mxu0
        %v613 = vpop.f32.mrb[0].mxu0
        %v614 = vadd.f32 0.0, %v613
        %v615 = vpop.f32.mrb[0].mxu0
        %616 = vmatprep.mubr.bf16.mxu0 0
        %617 = vmatmul.mubr.bf16.gmra.mrb[0].mxu0 %v313
        %v618 = vpop.f32.mrb[0].mxu0
        %v619 = vadd.f32 0.0, %v618
        %v620 = vpop.f32.mrb[0].mxu0
        %v621 = vpop.f32.mrb[0].mxu0
        %v622 = vadd.f32 0.0, %v621
        %v623 = vpop.f32.mrb[0].mxu0
        %624 = vmatprep.mubr.bf16.mxu0 0
        %625 = vmatmul.mubr.bf16.gmra.mrb[0].mxu0 %v314
        %v626 = vpop.f32.mrb[0].mxu0
        %v627 = vadd.f32 0.0, %v626
        %v628 = vpop.f32.mrb[0].mxu0
        %v629 = vpop.f32.mrb[0].mxu0
        %v630 = vadd.f32 0.0, %v629
        %v631 = vpop.f32.mrb[0].mxu0
        %632 = vmatprep.mubr.bf16.mxu0 0
        %633 = vmatmul.mubr.bf16.gmra.mrb[0].mxu0 %v315
        %v634 = vpop.f32.mrb[0].mxu0
        %v635 = vadd.f32 0.0, %v634
        %v636 = vpop.f32.mrb[0].mxu0
        %v637 = vpop.f32.mrb[0].mxu0
        %v638 = vadd.f32 0.0, %v637
        %v639 = vpop.f32.mrb[0].mxu0
        %640 = vmatprep.mubr.bf16.mxu0 0
        %641 = vmatmul.mubr.bf16.gmra.mrb[0].mxu0 %v316
        %v642 = vpop.f32.mrb[0].mxu0
        %v643 = vadd.f32 0.0, %v642
        %v644 = vpop.f32.mrb[0].mxu0
        %v645 = vpop.f32.mrb[0].mxu0
        %v646 = vadd.f32 0.0, %v645
        %v647 = vpop.f32.mrb[0].mxu0
        %648 = vmatprep.mubr.bf16.mxu0 0
        %649 = vmatmul.mubr.bf16.gmra.mrb[0].mxu0 %v317
        %v650 = vpop.f32.mrb[0].mxu0
        %v651 = vadd.f32 0.0, %v650
        %v652 = vpop.f32.mrb[0].mxu0
        %v653 = vpop.f32.mrb[0].mxu0
        %v654 = vadd.f32 0.0, %v653
        %v655 = vpop.f32.mrb[0].mxu0
        %656 = vmatprep.mubr.bf16.mxu0 0
        %657 = vmatmul.mubr.bf16.gmra.mrb[0].mxu0 %v318
        %v658 = vpop.f32.mrb[0].mxu0
        %v659 = vadd.f32 0.0, %v658
        %v660 = vpop.f32.mrb[0].mxu0
        %v661 = vpop.f32.mrb[0].mxu0
        %v662 = vadd.f32 0.0, %v661
        %v663 = vpop.f32.mrb[0].mxu0
        %664 = vdwg.mxu0
        %v665 = vpack.c.bf16 %v494, %v490
        %v666 = vpack.c.bf16 %v496, %v492
        %v667 = vpack.c.bf16 %v504, %v500
        %v668 = vpack.c.bf16 %v506, %v502
        %v669 = vpack.c.bf16 %v514, %v510
        %v670 = vpack.c.bf16 %v516, %v512
        %v671 = vpack.c.bf16 %v524, %v520
        %v672 = vpack.c.bf16 %v526, %v522
        %v673 = vpack.c.bf16 %v534, %v530
        %v674 = vpack.c.bf16 %v536, %v532
        %v675 = vpack.c.bf16 %v544, %v540
        %v676 = vpack.c.bf16 %v546, %v542
        %v677 = vpack.c.bf16 %v554, %v550
        %v678 = vpack.c.bf16 %v556, %v552
        %v679 = vpack.c.bf16 %v564, %v560
        %v680 = vpack.c.bf16 %v566, %v562
        %v697 = vunpack.c.l.b16 %v665
        %v698 = vunpack.c.l.b16 %v666
        %v699 = vunpack.c.h.b16 %v665
        %v700 = vunpack.c.h.b16 %v666
        %v701 = vunpack.c.l.b16 %v667
        %v702 = vunpack.c.l.b16 %v668
        %v703 = vunpack.c.h.b16 %v667
        %v704 = vunpack.c.h.b16 %v668
        %v705 = vunpack.c.l.b16 %v669
        %v706 = vunpack.c.l.b16 %v670
        %v707 = vunpack.c.h.b16 %v669
        %v708 = vunpack.c.h.b16 %v670
        %v709 = vunpack.c.l.b16 %v671
        %v710 = vunpack.c.l.b16 %v672
        %v711 = vunpack.c.h.b16 %v671
        %v712 = vunpack.c.h.b16 %v672
        %v713 = vunpack.c.l.b16 %v673
        %v714 = vunpack.c.l.b16 %v674
        %v715 = vunpack.c.h.b16 %v673
        %v716 = vunpack.c.h.b16 %v674
        %v717 = vunpack.c.l.b16 %v675
        %v718 = vunpack.c.l.b16 %v676
        %v719 = vunpack.c.h.b16 %v675
        %v720 = vunpack.c.h.b16 %v676
        %v721 = vunpack.c.l.b16 %v677
        %v722 = vunpack.c.l.b16 %v678
        %v723 = vunpack.c.h.b16 %v677
        %v724 = vunpack.c.h.b16 %v678
        %v725 = vunpack.c.l.b16 %v679
        %v726 = vunpack.c.l.b16 %v680
        %v727 = vunpack.c.h.b16 %v679
        %v728 = vunpack.c.h.b16 %v680
        %v729 = vpack.c.b16 %v698, %v697
        %v730 = vpack.c.b16 %v700, %v699
        %v731 = vpack.c.b16 %v702, %v701
        %v732 = vpack.c.b16 %v704, %v703
        %v733 = vpack.c.b16 %v706, %v705
        %v734 = vpack.c.b16 %v708, %v707
        %v735 = vpack.c.b16 %v710, %v709
        %v736 = vpack.c.b16 %v712, %v711
        %v737 = vpack.c.b16 %v714, %v713
        %v738 = vpack.c.b16 %v716, %v715
        %v739 = vpack.c.b16 %v718, %v717
        %v740 = vpack.c.b16 %v720, %v719
        %v741 = vpack.c.b16 %v722, %v721
        %v742 = vpack.c.b16 %v724, %v723
        %v743 = vpack.c.b16 %v726, %v725
        %v744 = vpack.c.b16 %v728, %v727
        %761 = vst [vmem:[%s196] sm:$0xff] %v729
        %762 = vst [vmem:[%s196 + $0x8] sm:$0xff] %v730
        %763 = vst [vmem:[%s196 + $0x10] sm:$0xff] %v731
        %764 = vst [vmem:[%s196 + $0x18] sm:$0xff] %v732
        %765 = vst [vmem:[%s196 + $0x20] sm:$0xff] %v733
        %766 = vst [vmem:[%s196 + $0x28] sm:$0xff] %v734
        %767 = vst [vmem:[%s196 + $0x30] sm:$0xff] %v735
        %768 = vst [vmem:[%s196 + $0x38] sm:$0xff] %v736
        %769 = vst [vmem:[%s196 + $0x40] sm:$0xff] %v737
        %770 = vst [vmem:[%s196 + $0x48] sm:$0xff] %v738
        %771 = vst [vmem:[%s196 + $0x50] sm:$0xff] %v739
        %772 = vst [vmem:[%s196 + $0x58] sm:$0xff] %v740
        %773 = vst [vmem:[%s196 + $0x60] sm:$0xff] %v741
        %774 = vst [vmem:[%s196 + $0x68] sm:$0xff] %v742
        %775 = vst [vmem:[%s196 + $0x70] sm:$0xff] %v743
        %776 = vst [vmem:[%s196 + $0x78] sm:$0xff] %v744
        %vm777 = vcmask 31744
        %778 = vst.msk [vmem:[%s228] sm:$0xff] %vm777, %v603
        %779 = vst.msk [vmem:[%s228 + $0x8] sm:$0xff] %vm777, %v606
        %780 = vst.msk [vmem:[%s228 + $0x10] sm:$0xff] %vm777, %v611
        %781 = vst.msk [vmem:[%s228 + $0x18] sm:$0xff] %vm777, %v614
        %782 = vst.msk [vmem:[%s228 + $0x20] sm:$0xff] %vm777, %v619
        %783 = vst.msk [vmem:[%s228 + $0x28] sm:$0xff] %vm777, %v622
        %784 = vst.msk [vmem:[%s228 + $0x30] sm:$0xff] %vm777, %v627
        %785 = vst.msk [vmem:[%s228 + $0x38] sm:$0xff] %vm777, %v630
        %786 = vst.msk [vmem:[%s228 + $0x40] sm:$0xff] %vm777, %v635
        %787 = vst.msk [vmem:[%s228 + $0x48] sm:$0xff] %vm777, %v638
        %788 = vst.msk [vmem:[%s228 + $0x50] sm:$0xff] %vm777, %v643
        %789 = vst.msk [vmem:[%s228 + $0x58] sm:$0xff] %vm777, %v646
        %790 = vst.msk [vmem:[%s228 + $0x60] sm:$0xff] %vm777, %v651
        %791 = vst.msk [vmem:[%s228 + $0x68] sm:$0xff] %vm777, %v654
        %792 = vst.msk [vmem:[%s228 + $0x70] sm:$0xff] %vm777, %v659
        %793 = vst.msk [vmem:[%s228 + $0x78] sm:$0xff] %vm777, %v662
        %s794 = sand.u32 %s92, 1
        %s795 = scalar_lea.sflag [#allocation3], %s794
        %s796 = sand.u32 %s92, 1
        %s797 = smul.addr %s796, 128
        %s798 = scalar_lea.vmem [#allocation2], %s797
        %s799 = smul.u32 16, %s23
        %p800 = scmp.lt.s32.totalorder %s22, 1
        %s801 = scalar_select %p800, %s22, 1
        %p802 = scmp.lt.s32.totalorder %s799, 31
        %s803 = scalar_select %p802, %s799, 31
        %s804 = smul.addr %s801, 32
        %s805 = sadd.s32 %s803, %s804
        %s806 = smul.addr %s805, 8
        %s807 = scalar_lea.vmem %s3, %s806
        // Predicated region
        $region29: #{tpu_custom_call.1} parent=27 // pred_check
          %p808 = pneg %p102
        $region30: #{tpu_custom_call.1} parent=27 // pred_check_branch
          %810 = sbr.rel (%p808) target = $region32
        $region31: #{tpu_custom_call.1} parent=27 // pred_region
          %s811 = smul.u32 16, %s23
          %s813 = ssub.s32 2048, 2048
          %814 = vsyncadd %s795, %s813
          %s815 = smul.addr %s811, 2
          %s816 = smul.addr %s22, 64
          %s817 = sadd.s32 %s815, %s816
          %s818 = smul.addr %s817, 64
          %s819 = scalar_lea.hbm %s2, %s818
          %s820 = sshll.u32 %s798, 4
          %s821 = int_to_ptr.vmem [resolvable:$true] %s820
          %826 = dma.vmem_to_hbm [thread:$0]  %s821, 2048, %s819, %s795, 128, 128, 8
        $region32: #{tpu_custom_call.1} parent=27 // pred_fallthru
          _
        // Predicated region
        $region33: #{tpu_custom_call.1} parent=27 // pred_check
          %p827 = pneg %p130
        $region34: #{tpu_custom_call.1} parent=27 // pred_check_branch
          %829 = sbr.rel (%p827) target = $region36
        $region35: #{tpu_custom_call.1} parent=27 // pred_region
          %s830 = smul.u32 16, %s23
        $region36: #{tpu_custom_call.1} parent=27 // pred_fallthru
          _
      $region28: #{tpu_custom_call.1} parent=5 // pred_fallthru
        _
      %p831 = scmp.le.s32.totalorder 2, %s13
      // Predicated region
      $region37: #{tpu_custom_call.1} parent=5 // pred_check
        %p832 = pneg %p831
      $region38: #{tpu_custom_call.1} parent=5 // pred_check_branch
        %834 = sbr.rel (%p832) target = $region40
      $region39: #{tpu_custom_call.1} parent=5 // pred_region
        %s835 = ssub.s32 %s13, 2
        // Predicated region
        $region41: #{tpu_custom_call.1} parent=39 // pred_check
          %p836 = pneg %p108
        $region42: #{tpu_custom_call.1} parent=39 // pred_check_branch
          %838 = sbr.rel (%p836) target = $region44
        $region43: #{tpu_custom_call.1} parent=39 // pred_region
          %s839 = sand.u32 %s93, 1
          %s840 = scalar_lea.sflag [#allocation3], %s839
          %s841 = sand.u32 %s93, 1
          %s842 = smul.addr %s841, 128
          %s843 = scalar_lea.vmem [#allocation2], %s842
          %844 = dma.done %s840, 2048
        $region44: #{tpu_custom_call.1} parent=39 // pred_fallthru
          _
        // Predicated region
        $region45: #{tpu_custom_call.1} parent=39 // pred_check
          %p845 = pneg %p136
        $region46: #{tpu_custom_call.1} parent=39 // pred_check_branch
          %847 = sbr.rel (%p845) target = $region48
        $region47: #{tpu_custom_call.1} parent=39 // pred_region
          %s848 = smul.u32 16, %s25
          %p849 = scmp.lt.s32.totalorder %s24, 1
          %s850 = scalar_select %p849, %s24, 1
          %p851 = scmp.lt.s32.totalorder %s848, 31
          %s852 = scalar_select %p851, %s848, 31
          %s853 = smul.addr %s850, 32
          %s854 = sadd.s32 %s852, %s853
          %s855 = smul.addr %s854, 8
          %s856 = scalar_lea.vmem %s3, %s855
        $region48: #{tpu_custom_call.1} parent=39 // pred_fallthru
          _
      $region40: #{tpu_custom_call.1} parent=5 // pred_fallthru
        _
    $region6: #{tpu_custom_call.1} parent=1 // loop_footer
      %s17 = sadd.s32 1, %s13
    $region7: #{tpu_custom_call.1} parent=1 // loop_footer_branch
      %12 = sbr.rel target = $region3
    $region8: #{tpu_custom_call.1} parent=1 // loop_exit
      _
    %857 = vsyncpa [#allocation3], 1
    %s858 = scalar_lea.sflag [#allocation3], 1
    %859 = vsyncpa %s858, 1

</llo_original>
